<compile_context>
chip_gen: v5e
topology: v5e:2x2
jax: 0.10.0
libtpu: 0.0.40
codegen_flags: <defaults>
</compile_context>

<pallas_src>
import math

import jax
import jax.numpy as jnp
from jax import lax
from jax.experimental import pallas as pl
from jax.experimental.pallas import tpu as pltpu

_VMEM_LIMIT_CACHE = None


def _vmem_limit_bytes():
    """Per-generation scoped-VMEM limit (~80% of physical, capped at 110 MiB)."""
    global _VMEM_LIMIT_CACHE
    if _VMEM_LIMIT_CACHE is None:
        cap = 64 * 1024 * 1024
        try:
            info = pltpu.get_tpu_info()
            cap = int(getattr(info, "vmem_capacity_bytes", cap))
        except Exception:
            pass
        _VMEM_LIMIT_CACHE = int(max(32 * 1024 * 1024,
                                    min(cap * 4 // 5, 110 * 1024 * 1024)))
    return _VMEM_LIMIT_CACHE


def _round_up(x, q):
    return (x + q - 1) // q * q


def _tile_for(dim, pref, quantum):
    """Tile hard-capped at `pref`: either the full (small) dim or a multiple of
    `quantum`; callers pad the array up to a multiple of the tile."""
    if dim <= quantum:
        return dim
    t = min(pref, _round_up(dim, quantum))
    return t - (t % quantum)


# ----------------------------------------------------------------------------
# Tiled Pallas linear (x @ W + b) with f32 VMEM accumulator, bf16 MXU operands.
# ----------------------------------------------------------------------------
def _make_linear_kernel(bf16_operands):
    def kernel(x_ref, w_ref, b_ref, o_ref, acc_ref):
        @pl.when(pl.program_id(2) == 0)
        def _():
            acc_ref[...] = jnp.zeros_like(acc_ref)

        x = x_ref[...]
        w = w_ref[...]
        if bf16_operands:
            x = x.astype(jnp.bfloat16)
            w = w.astype(jnp.bfloat16)
        acc_ref[...] += jnp.dot(x, w, preferred_element_type=jnp.float32)

        @pl.when(pl.program_id(2) == pl.num_programs(2) - 1)
        def _():
            o_ref[...] = (acc_ref[...] + b_ref[...]).astype(o_ref.dtype)

    return kernel


def pallas_linear(x2d, w, b, *, out_dtype=jnp.float32, bf16_operands=True,
                  tm_pref=256, tn_pref=512, tk_pref=512):
    m, k = x2d.shape
    n = w.shape[1]
    tm = _tile_for(m, tm_pref, 8)
    tk = _tile_for(k, tk_pref, 128)
    tn = _tile_for(n, tn_pref, 128)
    mp, kp, np_ = _round_up(m, tm), _round_up(k, tk), _round_up(n, tn)

    xp = x2d if (mp == m and kp == k) else jnp.pad(x2d, ((0, mp - m), (0, kp - k)))
    wp = w if (kp == k and np_ == n) else jnp.pad(w, ((0, kp - k), (0, np_ - n)))
    bp = b if np_ == n else jnp.pad(b, (0, np_ - n))

    grid = (mp // tm, np_ // tn, kp // tk)
    cost = pl.CostEstimate(
        flops=int(2 * mp * np_ * kp),
        transcendentals=0,
        bytes_accessed=int(4 * (mp * kp + kp * np_ + mp * np_ + np_)))

    out = pl.pallas_call(
        _make_linear_kernel(bf16_operands),
        out_shape=jax.ShapeDtypeStruct((mp, np_), out_dtype),
        grid=grid,
        in_specs=[
            pl.BlockSpec((tm, tk), lambda i, j, kk: (i, kk)),
            pl.BlockSpec((tk, tn), lambda i, j, kk: (kk, j)),
            pl.BlockSpec((1, tn), lambda i, j, kk: (0, j)),
        ],
        out_specs=pl.BlockSpec((tm, tn), lambda i, j, kk: (i, j)),
        scratch_shapes=[pltpu.VMEM((tm, tn), jnp.float32)],
        compiler_params=pltpu.CompilerParams(
            dimension_semantics=("parallel", "parallel", "arbitrary"),
            vmem_limit_bytes=_vmem_limit_bytes()),
        cost_estimate=cost,
    )(xp, wp, bp.reshape(1, np_))
    return out[:m, :n]


# ----------------------------------------------------------------------------
# Deformable key-aware attention kernel (grid = (batch, Lq tiles)).
# ----------------------------------------------------------------------------
def _make_deform_kernel(value_shapes, n_heads, n_points, d_head, tq):
    L = len(value_shapes)
    M, P, D = n_heads, n_points, d_head
    scale = 1.0 / math.sqrt(D)
    level_rows = []
    off = 0
    for (h, w) in value_shapes:
        level_rows.append(off)
        off += h * w

    def kernel(q_ref, kv_ref, loc_ref, out_ref):
        # Per-level constants, shared across all heads / points of this step:
        #   cxr:[1,W], cyr:[1,H] per-axis pixel coordinates
        #   RX:[W,HW], RY:[H,HW] 0/1 expansion matrices (RX[x,y*W+x]=RY[y,y*W+x]=1)
        consts = []
        for (H, W) in value_shapes:
            HW = H * W
            hw = lax.broadcasted_iota(jnp.int32, (1, HW), 1).astype(jnp.float32)
            y_of = jnp.floor((hw + 0.5) / W)   # exact integer arithmetic for HW << 2^23
            x_of = hw - y_of * W
            cxr = lax.broadcasted_iota(jnp.int32, (1, W), 1).astype(jnp.float32)
            cyr = lax.broadcasted_iota(jnp.int32, (1, H), 1).astype(jnp.float32)
            x_col = lax.broadcasted_iota(jnp.int32, (W, 1), 0).astype(jnp.float32)
            y_col = lax.broadcasted_iota(jnp.int32, (H, 1), 0).astype(jnp.float32)
            RX = jnp.where(x_of == x_col, 1.0, 0.0).astype(jnp.bfloat16)
            RY = jnp.where(y_of == y_col, 1.0, 0.0).astype(jnp.bfloat16)
            consts.append((cxr, cyr, RX, RY))

        for m in range(M):
            q_h = q_ref[0, :, m * D:(m + 1) * D]                           # [tq, D]
            loc_h = loc_ref[0, :, m * 2 * L * P:(m + 1) * 2 * L * P]       # [tq, 2LP]
            m_run = jnp.full((tq, 1), -1e30, dtype=jnp.float32)
            l_run = jnp.zeros((tq, 1), dtype=jnp.float32)
            acc = jnp.zeros((tq, D), dtype=jnp.float32)

            for lid, (H, W) in enumerate(value_shapes):
                HW = H * W
                row0 = level_rows[lid]
                cxr, cyr, RX, RY = consts[lid]
                kv_h = kv_ref[0, row0:row0 + HW, m * 2 * D:(m + 1) * 2 * D]  # [HW,2D] bf16

                for p in range(P):
                    cix = lid * P + p
                    ciy = L * P + lid * P + p
                    ix = loc_h[:, cix:cix + 1]                 # [tq, 1] pixel-space x
                    iy = loc_h[:, ciy:ciy + 1]                 # [tq, 1] pixel-space y
                    # separable tent weights (== bilinear, zeros padding)
                    wx = jnp.maximum(0.0, 1.0 - jnp.abs(ix - cxr)).astype(jnp.bfloat16)
                    wy = jnp.maximum(0.0, 1.0 - jnp.abs(iy - cyr)).astype(jnp.bfloat16)
                    # expand to [tq, HW] on the MXU (VPU: 1 mul + 1 cast per element)
                    wx_big = jnp.dot(wx, RX, preferred_element_type=jnp.float32)
                    wy_big = jnp.dot(wy, RY, preferred_element_type=jnp.float32)
                    wt = (wx_big * wy_big).astype(jnp.bfloat16)
                    # single bf16 MXU pass samples key|value together (f32 acc)
                    samp = jnp.dot(wt, kv_h, preferred_element_type=jnp.float32)
                    ks = samp[:, :D]
                    vs = samp[:, D:]
                    # online softmax over the L*P samples
                    s = jnp.sum(q_h * ks, axis=-1, keepdims=True) * scale   # [tq, 1]
                    m_new = jnp.maximum(m_run, s)
                    alpha = jnp.exp(m_run - m_new)
                    pw = jnp.exp(s - m_new)
                    l_run = alpha * l_run + pw
                    acc = alpha * acc + pw * vs
                    m_run = m_new

            out_ref[0, :, m * D:(m + 1) * D] = (
                acc * pl.reciprocal(l_run, approx=True)).astype(out_ref.dtype)

    return kernel


def deform_attn_key_aware_pallas(q, kv, loc_pix, value_shapes, n_heads, n_points,
                                 q_tile=128):
    # q:       [bs, Lq, C] f32
    # kv:      [bs, len_v, 2C] bf16, per-head interleaved (k_h | v_h) columns
    # loc_pix: [bs, Lq, M*2*L*P] f32 pixel-space locations, packed
    #          (head, xy, level, point) on the lane axis
    bs, len_q, C = q.shape
    len_v = kv.shape[1]
    M, P, L = n_heads, n_points, len(value_shapes)
    D = C // M
    lp2 = loc_pix.shape[-1]
    assert lp2 == M * 2 * L * P
    assert kv.shape[-1] == 2 * C

    tq = min(q_tile, _round_up(len_q, 8))
    tq = max(8, tq - (tq % 8))
    len_q_p = _round_up(len_q, tq)
    if len_q_p != len_q:
        q = jnp.pad(q, ((0, 0), (0, len_q_p - len_q), (0, 0)))
        loc_pix = jnp.pad(loc_pix, ((0, 0), (0, len_q_p - len_q), (0, 0)))
    grid = (bs, len_q_p // tq)

    kernel = _make_deform_kernel(value_shapes, M, P, D, tq)
    sum_hw = sum(h * w for (h, w) in value_shapes)
    sum_hpw = sum(h * w * (h + w) for (h, w) in value_shapes)
    cost = pl.CostEstimate(
        flops=int(2 * bs * len_q_p * M * P * (sum_hpw + sum_hw * 2 * D)
                  + 6 * bs * len_q_p * M * L * P * D),
        transcendentals=int(2 * bs * len_q_p * M * L * P + bs * len_q_p * M),
        bytes_accessed=int(4 * bs * len_q_p * (2 * C + lp2)
                           + 2 * bs * len_v * 2 * C))

    out = pl.pallas_call(
        kernel,
        out_shape=jax.ShapeDtypeStruct((bs, len_q_p, C), jnp.float32),
        grid=grid,
        in_specs=[
            pl.BlockSpec((1, tq, C), lambda b, qi: (b, qi, 0)),         # q (f32)
            pl.BlockSpec((1, len_v, 2 * C), lambda b, qi: (b, 0, 0)),   # kv (bf16)
            pl.BlockSpec((1, tq, lp2), lambda b, qi: (b, qi, 0)),       # pixel locs
        ],
        out_specs=pl.BlockSpec((1, tq, C), lambda b, qi: (b, qi, 0)),
        compiler_params=pltpu.CompilerParams(
            dimension_semantics=("parallel", "arbitrary"),
            vmem_limit_bytes=_vmem_limit_bytes()),
        cost_estimate=cost,
    )(q, kv, loc_pix)
    return out[:, :len_q]


# ----------------------------------------------------------------------------
# Full forward pass (Pallas path)
# ----------------------------------------------------------------------------
def msdeform_attn_kda_forward(query, refer_bbox, input_flatten, value_shapes,
                              params, n_heads, n_points, q_tile=128):
    bs, len_q, C = query.shape
    len_v = input_flatten.shape[1]
    L = len(value_shapes)
    M, P = n_heads, n_points
    assert C % M == 0
    assert sum(h * w for (h, w) in value_shapes) == len_v

    x_flat = input_flatten.reshape(-1, C)
    q_flat = query.reshape(-1, C)

    # Fused key|value projection: columns interleaved per head as (k_h | v_h),
    # emitted in bf16 (the attention kernel consumes it in bf16).
    D = C // M
    w_kv = jnp.concatenate(
        [params["W_key"].reshape(C, M, 1, D), params["W_value"].reshape(C, M, 1, D)],
        axis=2).reshape(C, 2 * C)
    b_kv = jnp.concatenate(
        [params["b_key"].reshape(M, 1, D), params["b_value"].reshape(M, 1, D)],
        axis=1).reshape(2 * C)
    kv = pallas_linear(x_flat, w_kv, b_kv, out_dtype=jnp.bfloat16
                       ).reshape(bs, len_v, 2 * C)

    q_proj = pallas_linear(q_flat, params["W_query"], params["b_query"]
                           ).reshape(bs, len_q, C)

    # Offset projection columns permuted once so the output is already packed as
    # (head, xy, level, point); kept with f32 operands (tiny, accuracy-sensitive).
    w_off = params["W_off"].reshape(C, M, L, P, 2).transpose(0, 1, 4, 2, 3
                                                             ).reshape(C, M * 2 * L * P)
    b_off = params["b_off"].reshape(M, L, P, 2).transpose(0, 3, 1, 2).reshape(-1)
    offsets = pallas_linear(q_flat, w_off, b_off, bf16_operands=False
                            ).reshape(bs, len_q, M, 2, L, P)

    # Sampling locations (refer_bbox last dim == 2 path), pre-scaled to pixel
    # space in the wrapper (grid_sample align_corners=False: pix = loc*size - 0.5).
    size_xy = jnp.array([[w for (h, w) in value_shapes],
                         [h for (h, w) in value_shapes]], jnp.float32)    # [2, L]
    add = offsets / size_xy[None, None, None, :, :, None]
    refer = refer_bbox.transpose(0, 1, 3, 2)                              # [bs,Lq,2,L]
    loc = refer[:, :, None, :, :, None] + add                             # [bs,Lq,M,2,L,P]
    loc_pix = loc * size_xy[None, None, None, :, :, None] - 0.5
    loc_pix = loc_pix.reshape(bs, len_q, M * 2 * L * P)

    out = deform_attn_key_aware_pallas(q_proj, kv, loc_pix, value_shapes,
                                       M, P, q_tile=q_tile)               # [bs,Lq,C]
    out = pallas_linear(out.reshape(-1, C), params["W_out"], params["b_out"])
    return out.reshape(bs, len_q, C)


# ----------------------------------------------------------------------------
# Pure-JAX reference (mirrors the PyTorch module) for correctness checking
# ----------------------------------------------------------------------------
def _grid_sample_bilinear_zeros(img, grid):
    # img: [B, C, H, W]; grid: [B, Hg, Wg, 2] in [-1, 1]
    B, C, H, W = img.shape
    gx, gy = grid[..., 0], grid[..., 1]
    ix = ((gx + 1.0) * W - 1.0) / 2.0
    iy = ((gy + 1.0) * H - 1.0) / 2.0
    x0 = jnp.floor(ix)
    y0 = jnp.floor(iy)
    x1 = x0 + 1.0
    y1 = y0 + 1.0
    wx1 = ix - x0
    wx0 = 1.0 - wx1
    wy1 = iy - y0
    wy0 = 1.0 - wy1

    def corner(xc, yc, w):
        inb = (xc >= 0) & (xc <= W - 1) & (yc >= 0) & (yc <= H - 1)
        xi = jnp.clip(xc, 0, W - 1).astype(jnp.int32)
        yi = jnp.clip(yc, 0, H - 1).astype(jnp.int32)

        def gather_b(img_b, yi_b, xi_b):
            return img_b[:, yi_b, xi_b]   # [C, Hg, Wg]

        vals = jax.vmap(gather_b)(img, yi, xi)   # [B, C, Hg, Wg]
        return vals * (w * inb.astype(img.dtype))[:, None, :, :]

    return (corner(x0, y0, wx0 * wy0) + corner(x1, y0, wx1 * wy0)
            + corner(x0, y1, wx0 * wy1) + corner(x1, y1, wx1 * wy1))


def msdeform_attn_kda_reference(query, refer_bbox, input_flatten, value_shapes,
                                params, n_heads, n_points):
    bs, len_q, C = query.shape
    len_v = input_flatten.shape[1]
    L = len(value_shapes)
    M, P = n_heads, n_points
    D = C // M

    value = input_flatten.reshape(-1, C) @ params["W_value"] + params["b_value"]
    key = input_flatten.reshape(-1, C) @ params["W_key"] + params["b_key"]
    value = value.reshape(bs, len_v, M, D)
    key = key.reshape(bs, len_v, M, D)
    offsets = (query.reshape(-1, C) @ params["W_off"] + params["b_off"]
               ).reshape(bs, len_q, M, L, P, 2)

    normalizer = jnp.array([[w, h] for (h, w) in value_shapes], jnp.float32)
    add = offsets / normalizer[None, None, None, :, None, :]
    sampling_locations = refer_bbox[:, :, None, :, None, :] + add
    grids = 2.0 * sampling_locations - 1.0

    sampling_value_list = []
    sampling_key_list = []
    off = 0
    for lid, (H, W) in enumerate(value_shapes):
        HW = H * W
        value_l = value[:, off:off + HW].reshape(bs, HW, M * D).transpose(0, 2, 1)
        value_l = value_l.reshape(bs * M, D, H, W)
        key_l = key[:, off:off + HW].reshape(bs, HW, M * D).transpose(0, 2, 1)
        key_l = key_l.reshape(bs * M, D, H, W)
        grid_l = grids[:, :, :, lid].transpose(0, 2, 1, 3, 4).reshape(bs * M, len_q, P, 2)
        sampling_value_list.append(_grid_sample_bilinear_zeros(value_l, grid_l))
        sampling_key_list.append(_grid_sample_bilinear_zeros(key_l, grid_l))
        off += HW

    key_s = jnp.stack(sampling_key_list, axis=3).reshape(bs * M, D, len_q, L * P)
    val_s = jnp.stack(sampling_value_list, axis=3).reshape(bs * M, D, len_q, L * P)
    key_s = key_s.transpose(0, 2, 3, 1).reshape(bs * M * len_q, L * P, D)
    val_s = val_s.transpose(0, 2, 3, 1).reshape(bs * M * len_q, L * P, D)

    q = query.reshape(-1, C) @ params["W_query"] + params["b_query"]
    q = q.reshape(bs, len_q, M, D).transpose(0, 2, 1, 3).reshape(bs * M * len_q, D)
    q = q[:, None, :]
    attn = jax.nn.softmax(
        jnp.einsum("bij,bkj->bik", q, key_s) / math.sqrt(D), axis=-1)
    out = jnp.einsum("bik,bkj->bij", attn, val_s)[:, 0, :]
    out = out.reshape(bs, M, len_q, D).transpose(0, 2, 1, 3).reshape(bs, len_q, C)
    out = out.reshape(-1, C) @ params["W_out"] + params["b_out"]
    return out.reshape(bs, len_q, C)


# ----------------------------------------------------------------------------
# Deterministic parameter init (mirrors MSDeformAttnKDA._reset_parameters)
# ----------------------------------------------------------------------------
def init_params(rng, d_model, n_heads, n_levels, n_points):
    C, M, L, P = d_model, n_heads, n_levels, n_points

    def xavier(key, fan_in, fan_out):
        bound = math.sqrt(6.0 / (fan_in + fan_out))
        return jax.random.uniform(key, (fan_in, fan_out), jnp.float32, -bound, bound)

    k1, k2, k3, k4 = jax.random.split(rng, 4)
    # sampling_offsets: weight = 0, bias = directional grid init
    thetas = jnp.arange(M, dtype=jnp.float32) * (2.0 * math.pi / M)
    grid_init = jnp.stack([jnp.cos(thetas), jnp.sin(thetas)], -1)        # [M, 2]
    grid_init = grid_init / jnp.max(jnp.abs(grid_init), axis=-1, keepdims=True)
    grid_init = jnp.tile(grid_init.reshape(M, 1, 1, 2), (1, L, P, 1))
    grid_init = grid_init * jnp.arange(1, P + 1, dtype=jnp.float32).reshape(1, 1, P, 1)

    return {
        "W_off": jnp.zeros((C, M * L * P * 2), jnp.float32),
        "b_off": grid_init.reshape(-1),
        "W_value": xavier(k1, C, C), "b_value": jnp.zeros((C,), jnp.float32),
        "W_key": xavier(k2, C, C),   "b_key": jnp.zeros((C,), jnp.float32),
        "W_query": xavier(k3, C, C), "b_query": jnp.zeros((C,), jnp.float32),
        "W_out": xavier(k4, C, C),   "b_out": jnp.zeros((C,), jnp.float32),
    }


# ----------------------------------------------------------------------------
if __name__ == "__main__":
    # small, module-consistent shapes
    d_model, n_heads, n_levels, n_points = 32, 4, 2, 4
    value_shapes = [(8, 8), (4, 4)]          # sum(H*W) = 80
    bs, len_q = 2, 16
    len_v = sum(h * w for (h, w) in value_shapes)

    rng = jax.random.PRNGKey(0)
    k_q, k_v, k_r, k_p, k_o = jax.random.split(rng, 5)
    query = jax.random.normal(k_q, (bs, len_q, d_model), jnp.float32)
    input_flatten = jax.random.normal(k_v, (bs, len_v, d_model), jnp.float32)
    refer_bbox = jax.random.uniform(k_r, (bs, len_q, n_levels, 2), jnp.float32,
                                    0.1, 0.9)
    params = init_params(k_p, d_model, n_heads, n_levels, n_points)
    # non-zero sampling-offset weights so the offset / column-permutation path
    # is actually exercised (the module init is zero only at t=0 of training).
    params["W_off"] = 0.05 * jax.random.normal(
        k_o, (d_model, n_heads * n_levels * n_points * 2), jnp.float32)

    out = msdeform_attn_kda_forward(query, refer_bbox, input_flatten,
                                    value_shapes, params, n_heads, n_points)
    out = jax.block_until_ready(out)

    ref = msdeform_attn_kda_reference(query, refer_bbox, input_flatten,
                                      value_shapes, params, n_heads, n_points)
    assert out.shape == (bs, len_q, d_model)
    max_err = float(jnp.max(jnp.abs(out - ref)))
    ref_scale = max(1.0, float(jnp.max(jnp.abs(ref))))
    # bf16 MXU projections + bf16 sampling weights/values + approx reciprocal
    # vs. an all-f32 reference: compare at bf16-pipeline tolerance.
    assert max_err < 5e-2 * ref_scale, \
        f"max abs error {max_err} (ref scale {ref_scale})"
    print("KERNEL_OK")
</pallas_src>

<mosaic_0001>
module attributes {stable_mosaic.version = 11 : i64} {
  func.func @kernel(%arg0: i32, %arg1: i32, %arg2: i32, %arg3: memref<160x32xf32, #tpu.memory_space<vmem>>, %arg4: memref<32x64xf32, #tpu.memory_space<vmem>>, %arg5: memref<1x64xf32, #tpu.memory_space<vmem>>, %arg6: memref<160x64xbf16, #tpu.memory_space<vmem>>, %arg7: memref<160x64xf32, #tpu.memory_space<vmem>>) attributes {dimension_semantics = [#tpu.dimension_semantics<parallel>, #tpu.dimension_semantics<parallel>, #tpu.dimension_semantics<arbitrary>], iteration_bounds = array<i64: 1, 1, 1>, scalar_prefetch = 0 : i64, scratch_operands = 1 : i64, tpu.core_type = #tpu.core_type<tc>, window_params = [{transform_indices = @transform_0, window_bounds = array<i64: 160, 32>}, {transform_indices = @transform_1, window_bounds = array<i64: 32, 64>}, {transform_indices = @transform_2, window_bounds = array<i64: 1, 64>}, {transform_indices = @transform_3, window_bounds = array<i64: 160, 64>}]} {
    %c0_i32 = arith.constant 0 : i32
    %0 = arith.cmpi eq, %arg2, %c0_i32 : i32
    %1 = arith.extui %0 : i1 to i32
    %c0_i32_0 = arith.constant 0 : i32
    %2 = arith.cmpi ne, %1, %c0_i32_0 : i32
    scf.if %2 {
      %cst_10 = arith.constant 0.000000e+00 : f32
      %14 = vector.broadcast %cst_10 : f32 to vector<160x64xf32>
      %c0_11 = arith.constant 0 : index
      %c0_12 = arith.constant 0 : index
      %15 = vector.load %arg7[%c0_11, %c0_12] : memref<160x64xf32, #tpu.memory_space<vmem>>, vector<160x64xf32>
      tpu.vector_store %arg7[%c0_11, %c0_12], %14 {strides = array<i32>} : memref<160x64xf32, #tpu.memory_space<vmem>>, vector<160x64xf32>,
    } else {
    }
    %c0 = arith.constant 0 : index
    %c0_1 = arith.constant 0 : index
    %3 = vector.load %arg3[%c0, %c0_1] : memref<160x32xf32, #tpu.memory_space<vmem>>, vector<160x32xf32>
    %c0_2 = arith.constant 0 : index
    %c0_3 = arith.constant 0 : index
    %4 = vector.load %arg4[%c0_2, %c0_3] : memref<32x64xf32, #tpu.memory_space<vmem>>, vector<32x64xf32>
    %5 = arith.truncf %3 : vector<160x32xf32> to vector<160x32xbf16>
    %6 = arith.truncf %4 : vector<32x64xf32> to vector<32x64xbf16>
    %c0_4 = arith.constant 0 : index
    %c0_5 = arith.constant 0 : index
    %7 = vector.load %arg7[%c0_4, %c0_5] : memref<160x64xf32, #tpu.memory_space<vmem>>, vector<160x64xf32>
    %cst = arith.constant dense<0.000000e+00> : vector<160x64xf32>
    %8 = tpu.matmul %5, %6, %cst {dimension_numbers = #tpu.dot_dimension_numbers<[1], [0], [0], [1], [0, 0, 1, 1], [], []>} : vector<160x32xbf16>, vector<32x64xbf16>, vector<160x64xf32> -> vector<160x64xf32>
    %9 = arith.addf %7, %8 : vector<160x64xf32>
    %c0_6 = arith.constant 0 : index
    %c0_7 = arith.constant 0 : index
    %10 = vector.load %arg7[%c0_6, %c0_7] : memref<160x64xf32, #tpu.memory_space<vmem>>, vector<160x64xf32>
    tpu.vector_store %arg7[%c0_6, %c0_7], %9 {strides = array<i32>} : memref<160x64xf32, #tpu.memory_space<vmem>>, vector<160x64xf32>,
    %c0_i32_8 = arith.constant 0 : i32
    %11 = arith.cmpi eq, %arg2, %c0_i32_8 : i32
    %12 = arith.extui %11 : i1 to i32
    %c0_i32_9 = arith.constant 0 : i32
    %13 = arith.cmpi ne, %12, %c0_i32_9 : i32
    scf.if %13 {
      %c0_10 = arith.constant 0 : index
      %c0_11 = arith.constant 0 : index
      %14 = vector.load %arg7[%c0_10, %c0_11] : memref<160x64xf32, #tpu.memory_space<vmem>>, vector<160x64xf32>
      %c0_12 = arith.constant 0 : index
      %c0_13 = arith.constant 0 : index
      %15 = vector.load %arg5[%c0_12, %c0_13] : memref<1x64xf32, #tpu.memory_space<vmem>>, vector<1x64xf32>
      %16 = vector.broadcast %15 : vector<1x64xf32> to vector<160x64xf32>
      %17 = arith.addf %14, %16 : vector<160x64xf32>
      %18 = arith.truncf %17 : vector<160x64xf32> to vector<160x64xbf16>
      %c0_14 = arith.constant 0 : index
      %c0_15 = arith.constant 0 : index
      %19 = vector.load %arg6[%c0_14, %c0_15] : memref<160x64xbf16, #tpu.memory_space<vmem>>, vector<160x64xbf16>
      tpu.vector_store %arg6[%c0_14, %c0_15], %18 {strides = array<i32>} : memref<160x64xbf16, #tpu.memory_space<vmem>>, vector<160x64xbf16>,
    } else {
    }
    return
  }
  func.func @transform_0(%arg0: i32, %arg1: i32, %arg2: i32) -> (i32, i32) {
    %c0_i32 = arith.constant 0 : i32
    return %arg0, %arg2 : i32, i32
  }
  func.func @transform_1(%arg0: i32, %arg1: i32, %arg2: i32) -> (i32, i32) {
    %c0_i32 = arith.constant 0 : i32
    return %arg2, %arg1 : i32, i32
  }
  func.func @transform_2(%arg0: i32, %arg1: i32, %arg2: i32) -> (i32, i32) {
    %c0_i32 = arith.constant 0 : i32
    %c0_i32_0 = arith.constant 0 : i32
    return %c0_i32, %arg1 : i32, i32
  }
  func.func @transform_3(%arg0: i32, %arg1: i32, %arg2: i32) -> (i32, i32) {
    %c0_i32 = arith.constant 0 : i32
    return %arg0, %arg1 : i32, i32
  }
}

</mosaic_0001>

<llo_original>
// kernel: tpu_custom_call.1
$region0: #{tpu_custom_call.1}
  #allocation0 [shape = 'u32[]', space=smem, size = 0x4, offset = 0x4, fixed_abs, tag = 'smem constant byte address 0x4 - core index']
  #allocation1 [shape = 'u32[72,128]{1,0:T(1,128)}', space=vmem, size = 0x9000, scoped, tag = 'internal scratch']
  #allocation2 [shape = 'f32[160,64]{1,0:T(8,128)}', space=vmem, size = 0x14000, scoped, tag = 'scratch operand']
  %s0 = inlined_call_operand.vmem [shape: f32[160,32], index: 0, kind: input, shape index: {}]
  %s1 = inlined_call_operand.vmem [shape: f32[32,64], index: 1, kind: input, shape index: {}]
  %s2 = inlined_call_operand.vmem [shape: f32[1,64], index: 2, kind: input, shape index: {}]
  %s3 = inlined_call_operand.vmem [shape: bf16[160,64], index: 3, kind: output, shape index: {}]
  %s4 = sld [smem:[#allocation0]]
  $region30: #{tpu_custom_call.1} parent=0
    _
  %s6 = ssub.s32 1, %s4
  %s7 = scalar_select 0, %s6, %s4
  // Predicated region
  $region2: #{tpu_custom_call.1} parent=0 // pred_check
    _
  $region3: #{tpu_custom_call.1} parent=0 // pred_check_branch
    %9 = sbr.rel (0) target = $region5
  $region4: #{tpu_custom_call.1} parent=0 // pred_region
    _
  $region5: #{tpu_custom_call.1} parent=0 // pred_fallthru
    _
  // Predicated region
  $region6: #{tpu_custom_call.1} parent=0 // pred_check
    _
  $region7: #{tpu_custom_call.1} parent=0 // pred_check_branch
    %11 = sbr.rel (0) target = $region9
  $region8: #{tpu_custom_call.1} parent=0 // pred_region
    _
  $region9: #{tpu_custom_call.1} parent=0 // pred_fallthru
    _
  // Predicated region
  $region10: #{tpu_custom_call.1} parent=0 // pred_check
    _
  $region11: #{tpu_custom_call.1} parent=0 // pred_check_branch
    %13 = sbr.rel (0) target = $region13
  $region12: #{tpu_custom_call.1} parent=0 // pred_region
    _
  $region13: #{tpu_custom_call.1} parent=0 // pred_fallthru
    _
  %p15 = scmp.eq.s32.totalorder 0, 0
  // Predicated region
  $region14: #{tpu_custom_call.1} parent=0 // pred_check
    %p16 = pneg %p15
  $region15: #{tpu_custom_call.1} parent=0 // pred_check_branch
    %18 = sbr.rel (%p16) target = $region17
  $region16: #{tpu_custom_call.1} parent=0 // pred_region
    %vm19 = vcmask 523264
    %20 = vst.msk [vmem:[#allocation2] sm:$0xff] %vm19, 0.0
    %21 = vst.msk [vmem:[#allocation2 + $0x8] sm:$0xff] %vm19, 0.0
    %22 = vst.msk [vmem:[#allocation2 + $0x10] sm:$0xff] %vm19, 0.0
    %23 = vst.msk [vmem:[#allocation2 + $0x18] sm:$0xff] %vm19, 0.0
    %24 = vst.msk [vmem:[#allocation2 + $0x20] sm:$0xff] %vm19, 0.0
    %25 = vst.msk [vmem:[#allocation2 + $0x28] sm:$0xff] %vm19, 0.0
    %26 = vst.msk [vmem:[#allocation2 + $0x30] sm:$0xff] %vm19, 0.0
    %27 = vst.msk [vmem:[#allocation2 + $0x38] sm:$0xff] %vm19, 0.0
    %28 = vst.msk [vmem:[#allocation2 + $0x40] sm:$0xff] %vm19, 0.0
    %29 = vst.msk [vmem:[#allocation2 + $0x48] sm:$0xff] %vm19, 0.0
    %30 = vst.msk [vmem:[#allocation2 + $0x50] sm:$0xff] %vm19, 0.0
    %31 = vst.msk [vmem:[#allocation2 + $0x58] sm:$0xff] %vm19, 0.0
    %32 = vst.msk [vmem:[#allocation2 + $0x60] sm:$0xff] %vm19, 0.0
    %33 = vst.msk [vmem:[#allocation2 + $0x68] sm:$0xff] %vm19, 0.0
    %34 = vst.msk [vmem:[#allocation2 + $0x70] sm:$0xff] %vm19, 0.0
    %35 = vst.msk [vmem:[#allocation2 + $0x78] sm:$0xff] %vm19, 0.0
    %36 = vst.msk [vmem:[#allocation2 + $0x80] sm:$0xff] %vm19, 0.0
    %37 = vst.msk [vmem:[#allocation2 + $0x88] sm:$0xff] %vm19, 0.0
    %38 = vst.msk [vmem:[#allocation2 + $0x90] sm:$0xff] %vm19, 0.0
    %39 = vst.msk [vmem:[#allocation2 + $0x98] sm:$0xff] %vm19, 0.0
  $region17: #{tpu_custom_call.1} parent=0 // pred_fallthru
    _
  %v40 = vld [vmem:[%s0] sm:$0xff]
  %v41 = vld [vmem:[%s0 + $0x8] sm:$0xff]
  %v42 = vld [vmem:[%s0 + $0x10] sm:$0xff]
  %v43 = vld [vmem:[%s0 + $0x18] sm:$0xff]
  %v44 = vld [vmem:[%s0 + $0x20] sm:$0xff]
  %v45 = vld [vmem:[%s0 + $0x28] sm:$0xff]
  %v46 = vld [vmem:[%s0 + $0x30] sm:$0xff]
  %v47 = vld [vmem:[%s0 + $0x38] sm:$0xff]
  %v48 = vld [vmem:[%s0 + $0x40] sm:$0xff]
  %v49 = vld [vmem:[%s0 + $0x48] sm:$0xff]
  %v50 = vld [vmem:[%s0 + $0x50] sm:$0xff]
  %v51 = vld [vmem:[%s0 + $0x58] sm:$0xff]
  %v52 = vld [vmem:[%s0 + $0x60] sm:$0xff]
  %v53 = vld [vmem:[%s0 + $0x68] sm:$0xff]
  %v54 = vld [vmem:[%s0 + $0x70] sm:$0xff]
  %v55 = vld [vmem:[%s0 + $0x78] sm:$0xff]
  %v56 = vld [vmem:[%s0 + $0x80] sm:$0xff]
  %v57 = vld [vmem:[%s0 + $0x88] sm:$0xff]
  %v58 = vld [vmem:[%s0 + $0x90] sm:$0xff]
  %v59 = vld [vmem:[%s0 + $0x98] sm:$0xff]
  %v60 = vld [vmem:[%s1] sm:$0xff]
  %v61 = vld [vmem:[%s1 + $0x8] sm:$0xff]
  %v62 = vld [vmem:[%s1 + $0x10] sm:$0xff]
  %v63 = vld [vmem:[%s1 + $0x18] sm:$0xff]
  %v64 = vpack.c.bf16 %v41, %v40
  %v65 = vpack.c.bf16 %v43, %v42
  %v66 = vpack.c.bf16 %v45, %v44
  %v67 = vpack.c.bf16 %v47, %v46
  %v68 = vpack.c.bf16 %v49, %v48
  %v69 = vpack.c.bf16 %v51, %v50
  %v70 = vpack.c.bf16 %v53, %v52
  %v71 = vpack.c.bf16 %v55, %v54
  %v72 = vpack.c.bf16 %v57, %v56
  %v73 = vpack.c.bf16 %v59, %v58
  %v74 = vpack.c.bf16 %v61, %v60
  %v75 = vpack.c.bf16 %v63, %v62
  %v76 = vld [vmem:[#allocation2] sm:$0xff]
  %v77 = vld [vmem:[#allocation2 + $0x8] sm:$0xff]
  %v78 = vld [vmem:[#allocation2 + $0x10] sm:$0xff]
  %v79 = vld [vmem:[#allocation2 + $0x18] sm:$0xff]
  %v80 = vld [vmem:[#allocation2 + $0x20] sm:$0xff]
  %v81 = vld [vmem:[#allocation2 + $0x28] sm:$0xff]
  %v82 = vld [vmem:[#allocation2 + $0x30] sm:$0xff]
  %v83 = vld [vmem:[#allocation2 + $0x38] sm:$0xff]
  %v84 = vld [vmem:[#allocation2 + $0x40] sm:$0xff]
  %v85 = vld [vmem:[#allocation2 + $0x48] sm:$0xff]
  %v86 = vld [vmem:[#allocation2 + $0x50] sm:$0xff]
  %v87 = vld [vmem:[#allocation2 + $0x58] sm:$0xff]
  %v88 = vld [vmem:[#allocation2 + $0x60] sm:$0xff]
  %v89 = vld [vmem:[#allocation2 + $0x68] sm:$0xff]
  %v90 = vld [vmem:[#allocation2 + $0x70] sm:$0xff]
  %v91 = vld [vmem:[#allocation2 + $0x78] sm:$0xff]
  %v92 = vld [vmem:[#allocation2 + $0x80] sm:$0xff]
  %v93 = vld [vmem:[#allocation2 + $0x88] sm:$0xff]
  %v94 = vld [vmem:[#allocation2 + $0x90] sm:$0xff]
  %v95 = vld [vmem:[#allocation2 + $0x98] sm:$0xff]
  %vm96 = vcmask 261120
  %v98 = vsel %vm96, %v64, 0
  %v101 = vsel %vm96, %v65, 0
  %v104 = vsel %vm96, %v66, 0
  %v107 = vsel %vm96, %v67, 0
  %v110 = vsel %vm96, %v68, 0
  %v113 = vsel %vm96, %v69, 0
  %v116 = vsel %vm96, %v70, 0
  %v119 = vsel %vm96, %v71, 0
  %v122 = vsel %vm96, %v72, 0
  %v125 = vsel %vm96, %v73, 0
  %127 = vmatpush.bf16.msra.mxu0 0
  %128 = vmatpush.bf16.msra.mxu0 0
  %129 = vmatpush.bf16.msra.mxu0 0
  %130 = vmatpush.bf16.msra.mxu0 0
  %131 = vmatpush.bf16.msra.mxu0 0
  %132 = vmatpush.bf16.msra.mxu0 0
  %133 = vmatpush.bf16.msra.mxu0 %v75
  %134 = vmatpush.bf16.msra.mxu0 %v74
  %135 = vmatmul.bf16.gmra.mxu0 %v98
  %v136 = vpop.f32.mrf.mxu0
  %v137 = vadd.f32 0.0, %v136
  %v138 = vpop.f32.mrf.mxu0
  %v139 = vadd.f32 0.0, %v138
  %140 = vmatmul.bf16.gmra.mxu0 %v101
  %v141 = vpop.f32.mrf.mxu0
  %v142 = vadd.f32 0.0, %v141
  %v143 = vpop.f32.mrf.mxu0
  %v144 = vadd.f32 0.0, %v143
  %145 = vmatmul.bf16.gmra.mxu0 %v104
  %v146 = vpop.f32.mrf.mxu0
  %v147 = vadd.f32 0.0, %v146
  %v148 = vpop.f32.mrf.mxu0
  %v149 = vadd.f32 0.0, %v148
  %150 = vmatmul.bf16.gmra.mxu0 %v107
  %v151 = vpop.f32.mrf.mxu0
  %v152 = vadd.f32 0.0, %v151
  %v153 = vpop.f32.mrf.mxu0
  %v154 = vadd.f32 0.0, %v153
  %155 = vmatmul.bf16.gmra.mxu0 %v110
  %v156 = vpop.f32.mrf.mxu0
  %v157 = vadd.f32 0.0, %v156
  %v158 = vpop.f32.mrf.mxu0
  %v159 = vadd.f32 0.0, %v158
  %160 = vmatmul.bf16.gmra.mxu0 %v113
  %v161 = vpop.f32.mrf.mxu0
  %v162 = vadd.f32 0.0, %v161
  %v163 = vpop.f32.mrf.mxu0
  %v164 = vadd.f32 0.0, %v163
  %165 = vmatmul.bf16.gmra.mxu0 %v116
  %v166 = vpop.f32.mrf.mxu0
  %v167 = vadd.f32 0.0, %v166
  %v168 = vpop.f32.mrf.mxu0
  %v169 = vadd.f32 0.0, %v168
  %170 = vmatmul.bf16.gmra.mxu0 %v119
  %v171 = vpop.f32.mrf.mxu0
  %v172 = vadd.f32 0.0, %v171
  %v173 = vpop.f32.mrf.mxu0
  %v174 = vadd.f32 0.0, %v173
  %175 = vmatmul.bf16.gmra.mxu0 %v122
  %v176 = vpop.f32.mrf.mxu0
  %v177 = vadd.f32 0.0, %v176
  %v178 = vpop.f32.mrf.mxu0
  %v179 = vadd.f32 0.0, %v178
  %180 = vmatmul.bf16.gmra.mxu0 %v125
  %v181 = vpop.f32.mrf.mxu0
  %v182 = vadd.f32 0.0, %v181
  %v183 = vpop.f32.mrf.mxu0
  %v184 = vadd.f32 0.0, %v183
  %185 = vdwg.mxu0
  %v186 = vadd.f32 %v76, %v137
  %v187 = vadd.f32 %v77, %v139
  %v188 = vadd.f32 %v78, %v142
  %v189 = vadd.f32 %v79, %v144
  %v190 = vadd.f32 %v80, %v147
  %v191 = vadd.f32 %v81, %v149
  %v192 = vadd.f32 %v82, %v152
  %v193 = vadd.f32 %v83, %v154
  %v194 = vadd.f32 %v84, %v157
  %v195 = vadd.f32 %v85, %v159
  %v196 = vadd.f32 %v86, %v162
  %v197 = vadd.f32 %v87, %v164
  %v198 = vadd.f32 %v88, %v167
  %v199 = vadd.f32 %v89, %v169
  %v200 = vadd.f32 %v90, %v172
  %v201 = vadd.f32 %v91, %v174
  %v202 = vadd.f32 %v92, %v177
  %v203 = vadd.f32 %v93, %v179
  %v204 = vadd.f32 %v94, %v182
  %v205 = vadd.f32 %v95, %v184
  %vm206 = vcmask 523264
  %207 = vst.msk [vmem:[#allocation2] sm:$0xff] %vm206, %v186
  %208 = vst.msk [vmem:[#allocation2 + $0x8] sm:$0xff] %vm206, %v187
  %209 = vst.msk [vmem:[#allocation2 + $0x10] sm:$0xff] %vm206, %v188
  %210 = vst.msk [vmem:[#allocation2 + $0x18] sm:$0xff] %vm206, %v189
  %211 = vst.msk [vmem:[#allocation2 + $0x20] sm:$0xff] %vm206, %v190
  %212 = vst.msk [vmem:[#allocation2 + $0x28] sm:$0xff] %vm206, %v191
  %213 = vst.msk [vmem:[#allocation2 + $0x30] sm:$0xff] %vm206, %v192
  %214 = vst.msk [vmem:[#allocation2 + $0x38] sm:$0xff] %vm206, %v193
  %215 = vst.msk [vmem:[#allocation2 + $0x40] sm:$0xff] %vm206, %v194
  %216 = vst.msk [vmem:[#allocation2 + $0x48] sm:$0xff] %vm206, %v195
  %217 = vst.msk [vmem:[#allocation2 + $0x50] sm:$0xff] %vm206, %v196
  %218 = vst.msk [vmem:[#allocation2 + $0x58] sm:$0xff] %vm206, %v197
  %219 = vst.msk [vmem:[#allocation2 + $0x60] sm:$0xff] %vm206, %v198
  %220 = vst.msk [vmem:[#allocation2 + $0x68] sm:$0xff] %vm206, %v199
  %221 = vst.msk [vmem:[#allocation2 + $0x70] sm:$0xff] %vm206, %v200
  %222 = vst.msk [vmem:[#allocation2 + $0x78] sm:$0xff] %vm206, %v201
  %223 = vst.msk [vmem:[#allocation2 + $0x80] sm:$0xff] %vm206, %v202
  %224 = vst.msk [vmem:[#allocation2 + $0x88] sm:$0xff] %vm206, %v203
  %225 = vst.msk [vmem:[#allocation2 + $0x90] sm:$0xff] %vm206, %v204
  %226 = vst.msk [vmem:[#allocation2 + $0x98] sm:$0xff] %vm206, %v205
  // Predicated region
  $region18: #{tpu_custom_call.1} parent=0 // pred_check
    %p227 = pneg %p15
  $region19: #{tpu_custom_call.1} parent=0 // pred_check_branch
    %229 = sbr.rel (%p227) target = $region21
  $region20: #{tpu_custom_call.1} parent=0 // pred_region
    %v230 = vld [vmem:[#allocation2] sm:$0xff]
    %v231 = vld [vmem:[#allocation2 + $0x8] sm:$0xff]
    %v232 = vld [vmem:[#allocation2 + $0x10] sm:$0xff]
    %v233 = vld [vmem:[#allocation2 + $0x18] sm:$0xff]
    %v234 = vld [vmem:[#allocation2 + $0x20] sm:$0xff]
    %v235 = vld [vmem:[#allocation2 + $0x28] sm:$0xff]
    %v236 = vld [vmem:[#allocation2 + $0x30] sm:$0xff]
    %v237 = vld [vmem:[#allocation2 + $0x38] sm:$0xff]
    %v238 = vld [vmem:[#allocation2 + $0x40] sm:$0xff]
    %v239 = vld [vmem:[#allocation2 + $0x48] sm:$0xff]
    %v240 = vld [vmem:[#allocation2 + $0x50] sm:$0xff]
    %v241 = vld [vmem:[#allocation2 + $0x58] sm:$0xff]
    %v242 = vld [vmem:[#allocation2 + $0x60] sm:$0xff]
    %v243 = vld [vmem:[#allocation2 + $0x68] sm:$0xff]
    %v244 = vld [vmem:[#allocation2 + $0x70] sm:$0xff]
    %v245 = vld [vmem:[#allocation2 + $0x78] sm:$0xff]
    %v246 = vld [vmem:[#allocation2 + $0x80] sm:$0xff]
    %v247 = vld [vmem:[#allocation2 + $0x88] sm:$0xff]
    %v248 = vld [vmem:[#allocation2 + $0x90] sm:$0xff]
    %v249 = vld [vmem:[#allocation2 + $0x98] sm:$0xff]
    %v250 = vld [vmem:[%s2] sm:$0x1]
    %v252 = vperm.slane %v250, 0
    %v254 = vadd.f32 %v230, %v252
    %v255 = vadd.f32 %v231, %v252
    %v256 = vadd.f32 %v232, %v252
    %v257 = vadd.f32 %v233, %v252
    %v258 = vadd.f32 %v234, %v252
    %v259 = vadd.f32 %v235, %v252
    %v260 = vadd.f32 %v236, %v252
    %v261 = vadd.f32 %v237, %v252
    %v262 = vadd.f32 %v238, %v252
    %v263 = vadd.f32 %v239, %v252
    %v264 = vadd.f32 %v240, %v252
    %v265 = vadd.f32 %v241, %v252
    %v266 = vadd.f32 %v242, %v252
    %v267 = vadd.f32 %v243, %v252
    %v268 = vadd.f32 %v244, %v252
    %v269 = vadd.f32 %v245, %v252
    %v270 = vadd.f32 %v246, %v252
    %v271 = vadd.f32 %v247, %v252
    %v272 = vadd.f32 %v248, %v252
    %v273 = vadd.f32 %v249, %v252
    %v274 = vpack.c.bf16 %v254, %v254
    %v275 = vpack.c.bf16 %v255, %v255
    %v276 = vpack.c.bf16 %v256, %v256
    %v277 = vpack.c.bf16 %v257, %v257
    %v278 = vpack.c.bf16 %v258, %v258
    %v279 = vpack.c.bf16 %v259, %v259
    %v280 = vpack.c.bf16 %v260, %v260
    %v281 = vpack.c.bf16 %v261, %v261
    %v282 = vpack.c.bf16 %v262, %v262
    %v283 = vpack.c.bf16 %v263, %v263
    %v284 = vpack.c.bf16 %v264, %v264
    %v285 = vpack.c.bf16 %v265, %v265
    %v286 = vpack.c.bf16 %v266, %v266
    %v287 = vpack.c.bf16 %v267, %v267
    %v288 = vpack.c.bf16 %v268, %v268
    %v289 = vpack.c.bf16 %v269, %v269
    %v290 = vpack.c.bf16 %v270, %v270
    %v291 = vpack.c.bf16 %v271, %v271
    %v292 = vpack.c.bf16 %v272, %v272
    %v293 = vpack.c.bf16 %v273, %v273
    %vm294 = vcmask 519168
    %295 = vst.msk [vmem:[%s3] sm:$0xf] %vm294, %v274
    %296 = vst.msk [vmem:[%s3 + $0x4] sm:$0xf] %vm294, %v275
    %297 = vst.msk [vmem:[%s3 + $0x8] sm:$0xf] %vm294, %v276
    %298 = vst.msk [vmem:[%s3 + $0xc] sm:$0xf] %vm294, %v277
    %299 = vst.msk [vmem:[%s3 + $0x10] sm:$0xf] %vm294, %v278
    %300 = vst.msk [vmem:[%s3 + $0x14] sm:$0xf] %vm294, %v279
    %301 = vst.msk [vmem:[%s3 + $0x18] sm:$0xf] %vm294, %v280
    %302 = vst.msk [vmem:[%s3 + $0x1c] sm:$0xf] %vm294, %v281
    %303 = vst.msk [vmem:[%s3 + $0x20] sm:$0xf] %vm294, %v282
    %304 = vst.msk [vmem:[%s3 + $0x24] sm:$0xf] %vm294, %v283
    %305 = vst.msk [vmem:[%s3 + $0x28] sm:$0xf] %vm294, %v284
    %306 = vst.msk [vmem:[%s3 + $0x2c] sm:$0xf] %vm294, %v285
    %307 = vst.msk [vmem:[%s3 + $0x30] sm:$0xf] %vm294, %v286
    %308 = vst.msk [vmem:[%s3 + $0x34] sm:$0xf] %vm294, %v287
    %309 = vst.msk [vmem:[%s3 + $0x38] sm:$0xf] %vm294, %v288
    %310 = vst.msk [vmem:[%s3 + $0x3c] sm:$0xf] %vm294, %v289
    %311 = vst.msk [vmem:[%s3 + $0x40] sm:$0xf] %vm294, %v290
    %312 = vst.msk [vmem:[%s3 + $0x44] sm:$0xf] %vm294, %v291
    %313 = vst.msk [vmem:[%s3 + $0x48] sm:$0xf] %vm294, %v292
    %314 = vst.msk [vmem:[%s3 + $0x4c] sm:$0xf] %vm294, %v293
  $region21: #{tpu_custom_call.1} parent=0 // pred_fallthru
    _
  // Predicated region
  $region22: #{tpu_custom_call.1} parent=0 // pred_check
    _
  $region23: #{tpu_custom_call.1} parent=0 // pred_check_branch
    %316 = sbr.rel (0) target = $region25
  $region24: #{tpu_custom_call.1} parent=0 // pred_region
    _
  $region25: #{tpu_custom_call.1} parent=0 // pred_fallthru
    _
  // Predicated region
  $region26: #{tpu_custom_call.1} parent=0 // pred_check
    _
  $region27: #{tpu_custom_call.1} parent=0 // pred_check_branch
    %318 = sbr.rel (0) target = $region29
  $region28: #{tpu_custom_call.1} parent=0 // pred_region
    _
  $region29: #{tpu_custom_call.1} parent=0 // pred_fallthru
    _

</llo_original>
